<compile_context>
chip_gen: v6e
topology: v6e:2x2x1
jax: 0.10.0
libtpu: 0.0.40
codegen_flags: <defaults>
</compile_context>

<pallas_src>
import math

import jax
import jax.numpy as jnp
from jax import lax
from jax.experimental import pallas as pl
from jax.experimental.pallas import tpu as pltpu


# GELU(approximate='tanh'):  0.5*x*(1+tanh(sqrt(2/pi)*(x+0.044715*x^3)))
#                          = x * sigmoid(k0*x + k1*x^3)   with k0=2*sqrt(2/pi)
_K0 = 2.0 * math.sqrt(2.0 / math.pi)
_K1 = _K0 * 0.044715


def _gelu_tanh(x):
    # Mathematically identical to torch.nn.GELU(approximate='tanh'); fewer VALU ops
    # than the 0.5*(1+tanh(...)) form, sigmoid goes to the EUP.
    return x * jax.nn.sigmoid(_K0 * x + _K1 * (x * x * x))


def _mlp_kernel(x_ref, w1_ref, b1_ref, w2_ref, b2_ref, o_ref, acc_ref):
    # x_ref : (tm, C)      w1_ref: (C, th)   b1_ref: (1, th)
    # w2_ref: (th, C)      b2_ref: (1, C)
    # o_ref : (tm, C)      acc_ref: (tm, C) f32 scratch accumulator
    h = pl.program_id(1)

    @pl.when(h == 0)
    def _():
        acc_ref[...] = jnp.zeros_like(acc_ref)

    # First matmul: (tm, C) @ (C, th) -> (tm, th).  Operands stay in their native
    # dtype (bf16 MXU path when applicable); accumulate in f32.
    a = lax.dot_general(
        x_ref[...], w1_ref[...],
        dimension_numbers=(((1,), (0,)), ((), ())),
        preferred_element_type=jnp.float32,
    )
    a = _gelu_tanh(a + b1_ref[...].astype(jnp.float32))

    # Second matmul: (tm, th) @ (th, C) -> (tm, C), accumulated over H tiles.
    acc_ref[...] += lax.dot_general(
        a.astype(w2_ref.dtype), w2_ref[...],
        dimension_numbers=(((1,), (0,)), ((), ())),
        preferred_element_type=jnp.float32,
    )

    @pl.when(h == pl.num_programs(1) - 1)
    def _():
        o_ref[...] = (acc_ref[...] + b2_ref[...].astype(jnp.float32)).astype(o_ref.dtype)


def _round_up(n, m):
    return ((n + m - 1) // m) * m


def _vmem_capacity_bytes():
    try:
        info = pltpu.get_tpu_info()
        cap = getattr(info, "vmem_capacity_bytes", None)
        if cap:
            return int(cap)
    except Exception:
        pass
    return 64 * 1024 * 1024  # conservative fallback (v7x per-TC VMEM)


def _vmem_est(tm, th, C, in_bytes, w_bytes):
    # Double-buffered BlockSpec tiles + f32 accumulator + matmul-1 intermediate.
    return (
        2 * tm * C * in_bytes          # x tile
        + 2 * C * th * w_bytes         # W1 slice
        + 2 * th * C * w_bytes         # W2 slice
        + 2 * 2 * (th + C) * w_bytes   # biases
        + 2 * tm * C * in_bytes        # output tile
        + tm * C * 4                   # f32 accumulator scratch
        + tm * th * (4 + w_bytes)      # matmul-1 f32 result + its cast for matmul-2
    )


def mlp_pallas(x, w1, b1, w2, b2, *, tm=None, th=None):
    """x: (B, T, C). w1: (H, C), b1: (H,), w2: (C, H), b2: (C,)  (PyTorch layouts)."""
    B, T, C = x.shape
    H = w1.shape[0]
    M = B * T

    in_bytes = jnp.dtype(x.dtype).itemsize
    w_bytes = jnp.dtype(w1.dtype).itemsize
    sub = 16 if in_bytes == 2 else 8

    vmem_cap = _vmem_capacity_bytes()
    big_vmem = vmem_cap >= 96 * 1024 * 1024            # v5e/v6e (128 MiB) vs v7x (64 MiB)
    budget_cap = (110 if big_vmem else 56) * 1024 * 1024

    # ---- row tile (tm): amortizes weight re-streaming; prefer a divisor of M ----
    if tm is None:
        target = 1024 if big_vmem else 512
        if M <= target:
            tm = _round_up(M, sub)
        else:
            tm = target
            for cand in (target, target // 2, 256, 128, 64, 32, 16):
                if cand % sub == 0 and M % cand == 0:
                    tm = cand
                    break

    # ---- hidden tile (th): as large as the VMEM budget allows ----
    if th is None:
        if big_vmem:
            prefs = (1024, 512, 256, 128)
        elif C >= 8192:
            prefs = (256, 128)
        else:
            prefs = (512, 256, 128)
        th = next((c for c in prefs if H % c == 0), H)
    assert H % th == 0

    # ---- fit tiles to the per-generation VMEM budget ----
    est = _vmem_est(tm, th, C, in_bytes, w_bytes)
    while est > budget_cap and th > 128 and th % 2 == 0 and H % (th // 2) == 0:
        th //= 2
        est = _vmem_est(tm, th, C, in_bytes, w_bytes)
    while est > budget_cap and tm > 256 and (tm // 2) % sub == 0:
        tm //= 2
        est = _vmem_est(tm, th, C, in_bytes, w_bytes)
    # TODO(synk): add a contraction (C-axis) tiling path for very large n_embd
    # (C >= 8K) instead of holding full (tm, C) x/out/acc tiles.

    vmem_limit = int(min(max(est * 5 // 4, 32 * 1024 * 1024), budget_cap))
    vmem_limit = max(vmem_limit, int(est))
    vmem_limit = min(vmem_limit, vmem_cap)

    # ---- padding only when no divisor tile was found (rare) ----
    x2 = x.reshape(M, C)
    Mp = _round_up(M, tm)
    if Mp != M:
        x2 = jnp.pad(x2, ((0, Mp - M), (0, 0)))

    # One-time weight transposes -> standard (K, N)-layout RHS for both matmuls.
    w1t = jnp.transpose(w1)      # (C, H)
    w2t = jnp.transpose(w2)      # (H, C)
    b1_r = b1.reshape(1, H)
    b2_r = b2.reshape(1, C)

    row_tiles = Mp // tm
    pad_bytes = 2 * M * C * in_bytes if Mp != M else 0
    cost = pl.CostEstimate(
        flops=4 * M * C * H,                 # two matmuls
        transcendentals=M * H,               # sigmoid in GELU
        bytes_accessed=int(
            2 * Mp * C * in_bytes                                # x read + out write
            + row_tiles * ((2 * H * C + H + C) * w_bytes)        # weights/biases per row tile
            + pad_bytes
        ),
    )

    out = pl.pallas_call(
        _mlp_kernel,
        out_shape=jax.ShapeDtypeStruct((Mp, C), x.dtype),
        grid_spec=pltpu.PrefetchScalarGridSpec(
            num_scalar_prefetch=0,
            grid=(Mp // tm, H // th),
            in_specs=[
                pl.BlockSpec((tm, C), lambda i, h: (i, 0)),   # x rows (resident over H steps)
                pl.BlockSpec((C, th), lambda i, h: (0, h)),   # W1^T slice (C, th)
                pl.BlockSpec((1, th), lambda i, h: (0, h)),   # b1 slice
                pl.BlockSpec((th, C), lambda i, h: (h, 0)),   # W2^T slice (th, C)
                pl.BlockSpec((1, C), lambda i, h: (0, 0)),    # b2
            ],
            out_specs=pl.BlockSpec((tm, C), lambda i, h: (i, 0)),
            scratch_shapes=[pltpu.VMEM((tm, C), jnp.float32)],
        ),
        compiler_params=pltpu.CompilerParams(
            dimension_semantics=("parallel", "arbitrary"),
            vmem_limit_bytes=vmem_limit,
        ),
        cost_estimate=cost,
    )(x2, w1t, b1_r, w2t, b2_r)

    return out[:M].reshape(B, T, C)


def mlp_reference(x, w1, b1, w2, b2):
    h = jnp.einsum("btc,hc->bth", x, w1) + b1
    h = _gelu_tanh(h)
    return jnp.einsum("bth,ch->btc", h, w2) + b2


def _make_params(key, C, H, dtype=jnp.float32):
    kx, kw1, kb1, kw2, kb2 = jax.random.split(key, 5)
    # Deterministic init mirroring nn.Linear default (uniform in +/-1/sqrt(fan_in)).
    w1 = (jax.random.uniform(kw1, (H, C), jnp.float32, -1.0, 1.0) / math.sqrt(C)).astype(dtype)
    b1 = (jax.random.uniform(kb1, (H,), jnp.float32, -1.0, 1.0) / math.sqrt(C)).astype(dtype)
    w2 = (jax.random.uniform(kw2, (C, H), jnp.float32, -1.0, 1.0) / math.sqrt(H)).astype(dtype)
    b2 = (jax.random.uniform(kb2, (C,), jnp.float32, -1.0, 1.0) / math.sqrt(H)).astype(dtype)
    return kx, w1, b1, w2, b2


if __name__ == "__main__":
    key = jax.random.PRNGKey(0)
    k1, k2 = jax.random.split(key)

    # Test 1: small config consistent with the module (n_embd=32, hidden=4*32=128).
    B, T, C = 2, 8, 32
    H = 4 * C
    kx, w1, b1, w2, b2 = _make_params(k1, C, H)
    x = jax.random.normal(kx, (B, T, C), dtype=jnp.float32)

    y = mlp_pallas(x, w1, b1, w2, b2)
    jax.block_until_ready(y)
    y_ref = mlp_reference(x, w1, b1, w2, b2)
    assert y.shape == (B, T, C)
    assert jnp.allclose(y, y_ref, atol=2e-4, rtol=2e-4), "mismatch vs reference (small)"

    # Test 2: multi-tile config (M/tm = 2, H/th = 4) to exercise the accumulator
    # init/finalize path; lane-dense C=128.
    B2, T2, C2 = 2, 64, 128
    H2 = 4 * C2
    kx2, w1b, b1b, w2b, b2b = _make_params(k2, C2, H2)
    x2 = jax.random.normal(kx2, (B2, T2, C2), dtype=jnp.float32)

    y2 = mlp_pallas(x2, w1b, b1b, w2b, b2b, tm=64, th=128)
    jax.block_until_ready(y2)
    y2_ref = mlp_reference(x2, w1b, b1b, w2b, b2b)
    assert y2.shape == (B2, T2, C2)
    assert jnp.allclose(y2, y2_ref, atol=2e-4, rtol=2e-4), "mismatch vs reference (tiled)"

    print("KERNEL_OK")
</pallas_src>

<mosaic_0001>
module attributes {stable_mosaic.version = 11 : i64} {
  func.func @_mlp_kernel(%arg0: i32, %arg1: i32, %arg2: memref<16x32xf32, #tpu.memory_space<vmem>>, %arg3: memref<32x128xf32, #tpu.memory_space<vmem>>, %arg4: memref<1x128xf32, #tpu.memory_space<vmem>>, %arg5: memref<128x32xf32, #tpu.memory_space<vmem>>, %arg6: memref<1x32xf32, #tpu.memory_space<vmem>>, %arg7: memref<16x32xf32, #tpu.memory_space<vmem>>, %arg8: memref<16x32xf32, #tpu.memory_space<vmem>>) attributes {dimension_semantics = [#tpu.dimension_semantics<parallel>, #tpu.dimension_semantics<arbitrary>], iteration_bounds = array<i64: 1, 1>, scalar_prefetch = 0 : i64, scratch_operands = 1 : i64, tpu.core_type = #tpu.core_type<tc>, window_params = [{transform_indices = @transform_0, window_bounds = array<i64: 16, 32>}, {transform_indices = @transform_1, window_bounds = array<i64: 32, 128>}, {transform_indices = @transform_2, window_bounds = array<i64: 1, 128>}, {transform_indices = @transform_3, window_bounds = array<i64: 128, 32>}, {pipeline_mode = #tpu.pipeline_mode<synchronous>, transform_indices = @transform_4, window_bounds = array<i64: 1, 32>}, {transform_indices = @transform_5, window_bounds = array<i64: 16, 32>}]} {
    %c0_i32 = arith.constant 0 : i32
    %0 = arith.cmpi eq, %arg1, %c0_i32 : i32
    %1 = arith.extui %0 : i1 to i32
    %c0_i32_0 = arith.constant 0 : i32
    %2 = arith.cmpi ne, %1, %c0_i32_0 : i32
    scf.if %2 {
      %cst_18 = arith.constant 0.000000e+00 : f32
      %30 = vector.broadcast %cst_18 : f32 to vector<16x32xf32>
      %c0_19 = arith.constant 0 : index
      %c0_20 = arith.constant 0 : index
      %31 = vector.load %arg8[%c0_19, %c0_20] : memref<16x32xf32, #tpu.memory_space<vmem>>, vector<16x32xf32>
      tpu.vector_store %arg8[%c0_19, %c0_20], %30 {strides = array<i32>} : memref<16x32xf32, #tpu.memory_space<vmem>>, vector<16x32xf32>,
    } else {
    }
    %c0 = arith.constant 0 : index
    %c0_1 = arith.constant 0 : index
    %3 = vector.load %arg2[%c0, %c0_1] : memref<16x32xf32, #tpu.memory_space<vmem>>, vector<16x32xf32>
    %c0_2 = arith.constant 0 : index
    %c0_3 = arith.constant 0 : index
    %4 = vector.load %arg3[%c0_2, %c0_3] : memref<32x128xf32, #tpu.memory_space<vmem>>, vector<32x128xf32>
    %cst = arith.constant dense<0.000000e+00> : vector<16x128xf32>
    %5 = tpu.matmul %3, %4, %cst {dimension_numbers = #tpu.dot_dimension_numbers<[1], [0], [0], [1], [0, 0, 1, 1], [], []>} : vector<16x32xf32>, vector<32x128xf32>, vector<16x128xf32> -> vector<16x128xf32>
    %c0_4 = arith.constant 0 : index
    %c0_5 = arith.constant 0 : index
    %6 = vector.load %arg4[%c0_4, %c0_5] : memref<1x128xf32, #tpu.memory_space<vmem>>, vector<1x128xf32>
    %7 = vector.broadcast %6 : vector<1x128xf32> to vector<16x128xf32>
    %8 = arith.addf %5, %7 : vector<16x128xf32>
    %cst_6 = arith.constant 1.59576917 : f32
    %9 = vector.broadcast %cst_6 : f32 to vector<16x128xf32>
    %10 = arith.mulf %9, %8 : vector<16x128xf32>
    %11 = arith.mulf %8, %8 : vector<16x128xf32>
    %12 = arith.mulf %11, %8 : vector<16x128xf32>
    %cst_7 = arith.constant 0.0713548139 : f32
    %13 = vector.broadcast %cst_7 : f32 to vector<16x128xf32>
    %14 = arith.mulf %13, %12 : vector<16x128xf32>
    %15 = arith.addf %10, %14 : vector<16x128xf32>
    %16 = arith.negf %15 : vector<16x128xf32>
    %17 = math.exp %16 : vector<16x128xf32>
    %cst_8 = arith.constant 1.000000e+00 : f32
    %18 = vector.broadcast %cst_8 : f32 to vector<16x128xf32>
    %19 = arith.addf %18, %17 : vector<16x128xf32>
    %20 = arith.divf %18, %19 : vector<16x128xf32>
    %21 = arith.mulf %8, %20 : vector<16x128xf32>
    %c0_9 = arith.constant 0 : index
    %c0_10 = arith.constant 0 : index
    %22 = vector.load %arg8[%c0_9, %c0_10] : memref<16x32xf32, #tpu.memory_space<vmem>>, vector<16x32xf32>
    %c0_11 = arith.constant 0 : index
    %c0_12 = arith.constant 0 : index
    %23 = vector.load %arg5[%c0_11, %c0_12] : memref<128x32xf32, #tpu.memory_space<vmem>>, vector<128x32xf32>
    %cst_13 = arith.constant dense<0.000000e+00> : vector<16x32xf32>
    %24 = tpu.matmul %21, %23, %cst_13 {dimension_numbers = #tpu.dot_dimension_numbers<[1], [0], [0], [1], [0, 0, 1, 1], [], []>} : vector<16x128xf32>, vector<128x32xf32>, vector<16x32xf32> -> vector<16x32xf32>
    %25 = arith.addf %22, %24 : vector<16x32xf32>
    %c0_14 = arith.constant 0 : index
    %c0_15 = arith.constant 0 : index
    %26 = vector.load %arg8[%c0_14, %c0_15] : memref<16x32xf32, #tpu.memory_space<vmem>>, vector<16x32xf32>
    tpu.vector_store %arg8[%c0_14, %c0_15], %25 {strides = array<i32>} : memref<16x32xf32, #tpu.memory_space<vmem>>, vector<16x32xf32>,
    %c0_i32_16 = arith.constant 0 : i32
    %27 = arith.cmpi eq, %arg1, %c0_i32_16 : i32
    %28 = arith.extui %27 : i1 to i32
    %c0_i32_17 = arith.constant 0 : i32
    %29 = arith.cmpi ne, %28, %c0_i32_17 : i32
    scf.if %29 {
      %c0_18 = arith.constant 0 : index
      %c0_19 = arith.constant 0 : index
      %30 = vector.load %arg8[%c0_18, %c0_19] : memref<16x32xf32, #tpu.memory_space<vmem>>, vector<16x32xf32>
      %c0_20 = arith.constant 0 : index
      %c0_21 = arith.constant 0 : index
      %31 = vector.load %arg6[%c0_20, %c0_21] : memref<1x32xf32, #tpu.memory_space<vmem>>, vector<1x32xf32>
      %32 = vector.broadcast %31 : vector<1x32xf32> to vector<16x32xf32>
      %33 = arith.addf %30, %32 : vector<16x32xf32>
      %c0_22 = arith.constant 0 : index
      %c0_23 = arith.constant 0 : index
      %34 = vector.load %arg7[%c0_22, %c0_23] : memref<16x32xf32, #tpu.memory_space<vmem>>, vector<16x32xf32>
      tpu.vector_store %arg7[%c0_22, %c0_23], %33 {strides = array<i32>} : memref<16x32xf32, #tpu.memory_space<vmem>>, vector<16x32xf32>,
    } else {
    }
    return
  }
  func.func @transform_0(%arg0: i32, %arg1: i32) -> (i32, i32) {
    %c0_i32 = arith.constant 0 : i32
    %c0_i32_0 = arith.constant 0 : i32
    return %arg0, %c0_i32 : i32, i32
  }
  func.func @transform_1(%arg0: i32, %arg1: i32) -> (i32, i32) {
    %c0_i32 = arith.constant 0 : i32
    %c0_i32_0 = arith.constant 0 : i32
    return %c0_i32, %arg1 : i32, i32
  }
  func.func @transform_2(%arg0: i32, %arg1: i32) -> (i32, i32) {
    %c0_i32 = arith.constant 0 : i32
    %c0_i32_0 = arith.constant 0 : i32
    return %c0_i32, %arg1 : i32, i32
  }
  func.func @transform_3(%arg0: i32, %arg1: i32) -> (i32, i32) {
    %c0_i32 = arith.constant 0 : i32
    %c0_i32_0 = arith.constant 0 : i32
    return %arg1, %c0_i32 : i32, i32
  }
  func.func @transform_4(%arg0: i32, %arg1: i32) -> (i32, i32) {
    %c0_i32 = arith.constant 0 : i32
    %c0_i32_0 = arith.constant 0 : i32
    %c0_i32_1 = arith.constant 0 : i32
    return %c0_i32, %c0_i32_0 : i32, i32
  }
  func.func @transform_5(%arg0: i32, %arg1: i32) -> (i32, i32) {
    %c0_i32 = arith.constant 0 : i32
    %c0_i32_0 = arith.constant 0 : i32
    return %arg0, %c0_i32 : i32, i32
  }
}

</mosaic_0001>

<llo_original>
// kernel: tpu_custom_call.1
$region0: #{tpu_custom_call.1}
  #allocation0 [shape = 'u32[]', space=smem, size = 0x4, offset = 0x4, fixed_abs, tag = 'smem constant byte address 0x4 - core index']
  #allocation1 [shape = 'u32[144,128]{1,0:T(1,128)}', space=vmem, size = 0x12000, scoped, tag = 'internal scratch']
  #allocation2 [shape = 'f32[16,32]{1,0:T(8,128)}', space=vmem, size = 0x2000, scoped, tag = 'scratch operand']
  %s0 = inlined_call_operand.vmem [shape: f32[16,32], index: 0, kind: input, shape index: {}]
  %s1 = inlined_call_operand.vmem [shape: f32[32,128], index: 1, kind: input, shape index: {}]
  %s2 = inlined_call_operand.vmem [shape: f32[1,128], index: 2, kind: input, shape index: {}]
  %s3 = inlined_call_operand.vmem [shape: f32[128,32], index: 3, kind: input, shape index: {}]
  %s4 = inlined_call_operand.vmem [shape: f32[1,32], index: 4, kind: input, shape index: {}]
  %s5 = inlined_call_operand.hbm [shape: f32[16,32], index: 5, kind: output, shape index: {}]
  %s6 = sld [smem:[#allocation0]]
  $region38: #{tpu_custom_call.1} parent=0
    _
  %s8 = ssub.s32 1, %s6
  %s9 = scalar_select 0, %s8, %s6
  $region1: #{tpu_custom_call.1} parent=0
    #allocation3 [shape = 'u8[8192]{0}', space=vmem, size = 0x2000, scoped, tag = 'output window, operand 0, single buffered']
    #allocation4 [shape = 's32[1]{0}', space=sflag, size = 0x4, scoped, tag = 'scoped memory for tpu_custom_call.1']
    %10 = vsyncpa [#allocation4], 0
    // Predicated region
    $region2: #{tpu_custom_call.1} parent=1 // pred_check
      _
    $region3: #{tpu_custom_call.1} parent=1 // pred_check_branch
      %12 = sbr.rel (0) target = $region5
    $region4: #{tpu_custom_call.1} parent=1 // pred_region
      _
    $region5: #{tpu_custom_call.1} parent=1 // pred_fallthru
      _
    // Predicated region
    $region6: #{tpu_custom_call.1} parent=1 // pred_check
      _
    $region7: #{tpu_custom_call.1} parent=1 // pred_check_branch
      %14 = sbr.rel (0) target = $region9
    $region8: #{tpu_custom_call.1} parent=1 // pred_region
      _
    $region9: #{tpu_custom_call.1} parent=1 // pred_fallthru
      _
    // Predicated region
    $region10: #{tpu_custom_call.1} parent=1 // pred_check
      _
    $region11: #{tpu_custom_call.1} parent=1 // pred_check_branch
      %16 = sbr.rel (0) target = $region13
    $region12: #{tpu_custom_call.1} parent=1 // pred_region
      _
    $region13: #{tpu_custom_call.1} parent=1 // pred_fallthru
      _
    // Predicated region
    $region14: #{tpu_custom_call.1} parent=1 // pred_check
      _
    $region15: #{tpu_custom_call.1} parent=1 // pred_check_branch
      %18 = sbr.rel (0) target = $region17
    $region16: #{tpu_custom_call.1} parent=1 // pred_region
      _
    $region17: #{tpu_custom_call.1} parent=1 // pred_fallthru
      _
    // Predicated region
    $region18: #{tpu_custom_call.1} parent=1 // pred_check
      _
    $region19: #{tpu_custom_call.1} parent=1 // pred_check_branch
      %20 = sbr.rel (0) target = $region21
    $region20: #{tpu_custom_call.1} parent=1 // pred_region
      _
    $region21: #{tpu_custom_call.1} parent=1 // pred_fallthru
      _
    %p21 = scmp.eq.s32.totalorder 0, 0
    // Predicated region
    $region22: #{tpu_custom_call.1} parent=1 // pred_check
      %p22 = pneg %p21
    $region23: #{tpu_custom_call.1} parent=1 // pred_check_branch
      %24 = sbr.rel (%p22) target = $region25
    $region24: #{tpu_custom_call.1} parent=1 // pred_region
      %vm25 = vcmask 261120
      %26 = vst.msk [vmem:[#allocation2] sm:$0xff] %vm25, 0.0
      %27 = vst.msk [vmem:[#allocation2 + $0x8] sm:$0xff] %vm25, 0.0
    $region25: #{tpu_custom_call.1} parent=1 // pred_fallthru
      _
    %v28 = vld [vmem:[%s0] sm:$0xff]
    %v29 = vld [vmem:[%s0 + $0x8] sm:$0xff]
    %v30 = vld [vmem:[%s1] sm:$0xff]
    %v31 = vld [vmem:[%s1 + $0x8] sm:$0xff]
    %v32 = vld [vmem:[%s1 + $0x10] sm:$0xff]
    %v33 = vld [vmem:[%s1 + $0x18] sm:$0xff]
    %v34 = vld [vmem:[%s2] sm:$0x1]
    %v36 = vlaneseq
    %v37 = vshrl.u32 %v36, 7
    %v38 = vsub.s32 0, %v37
    %v39 = vrot.slane %v34, %v38
    %vm41 = vcmask 261120
    %v43 = vsel %vm41, %v28, 0
    %v46 = vsel %vm41, %v29, 0
    %48 = vmatprep.subr.mxu0 0.0
    %49 = vmatpush1.msra.mxu0 0.0
    %50 = vmatprep.subr.mxu0 0.0
    %51 = vmatpush1.msra.mxu0 0.0
    %52 = vmatprep.subr.mxu0 0.0
    %53 = vmatpush1.msra.mxu0 0.0
    %54 = vmatprep.subr.mxu0 0.0
    %55 = vmatpush1.msra.mxu0 0.0
    %56 = vmatprep.subr.mxu0 0.0
    %57 = vmatpush1.msra.mxu0 0.0
    %58 = vmatprep.subr.mxu0 0.0
    %59 = vmatpush1.msra.mxu0 0.0
    %60 = vmatprep.subr.mxu0 0.0
    %61 = vmatpush1.msra.mxu0 0.0
    %62 = vmatprep.subr.mxu0 0.0
    %63 = vmatpush1.msra.mxu0 0.0
    %64 = vmatprep.subr.mxu0 0.0
    %65 = vmatpush1.msra.mxu0 0.0
    %66 = vmatprep.subr.mxu0 0.0
    %67 = vmatpush1.msra.mxu0 0.0
    %68 = vmatprep.subr.mxu0 0.0
    %69 = vmatpush1.msra.mxu0 0.0
    %70 = vmatprep.subr.mxu0 0.0
    %71 = vmatpush1.msra.mxu0 0.0
    %72 = vmatprep.subr.mxu0 0.0
    %73 = vmatpush1.msra.mxu0 %v33
    %74 = vmatprep.subr.mxu0 0.0
    %75 = vmatpush1.msra.mxu0 %v32
    %76 = vmatprep.subr.mxu0 0.0
    %77 = vmatpush1.msra.mxu0 %v31
    %78 = vmatprep.subr.mxu0 0.0
    %79 = vmatpush1.msra.mxu0 %v30
    %80 = vmatprep.subr.mxu0 0.0
    %81 = vmatpush2.msra.mxu0 0.0
    %82 = vmatprep.subr.mxu0 0.0
    %83 = vmatpush2.msra.mxu0 0.0
    %84 = vmatprep.subr.mxu0 0.0
    %85 = vmatpush2.msra.mxu0 0.0
    %86 = vmatprep.subr.mxu0 0.0
    %87 = vmatpush2.msra.mxu0 0.0
    %88 = vmatprep.subr.mxu0 0.0
    %89 = vmatpush2.msra.mxu0 0.0
    %90 = vmatprep.subr.mxu0 0.0
    %91 = vmatpush2.msra.mxu0 0.0
    %92 = vmatprep.subr.mxu0 0.0
    %93 = vmatpush2.msra.mxu0 0.0
    %94 = vmatprep.subr.mxu0 0.0
    %95 = vmatpush2.msra.mxu0 0.0
    %96 = vmatprep.subr.mxu0 0.0
    %97 = vmatpush2.msra.mxu0 0.0
    %98 = vmatprep.subr.mxu0 0.0
    %99 = vmatpush2.msra.mxu0 0.0
    %100 = vmatprep.subr.mxu0 0.0
    %101 = vmatpush2.msra.mxu0 0.0
    %102 = vmatprep.subr.mxu0 0.0
    %103 = vmatpush2.msra.mxu0 0.0
    %104 = vmatprep.subr.mxu0 0.0
    %105 = vmatpush2.msra.mxu0 0.0
    %106 = vmatprep.subr.mxu0 0.0
    %107 = vmatpush2.msra.mxu0 0.0
    %108 = vmatprep.subr.mxu0 0.0
    %109 = vmatpush2.msra.mxu0 0.0
    %110 = vmatprep.subr.mxu0 0.0
    %111 = vmatpush2.msra.mxu0 0.0
    %112 = vmatprep.mubr.f32.mxu0 0.0
    %113 = vmatmul.mubr.f32.gmra.mxu0 %v43
    %v114 = vpop.f32.mrf.mxu0
    %v115 = vadd.f32 %v39, %v114
    %v116 = vpop.f32.mrf.mxu0
    %117 = vmatprep.mubr.f32.mxu0 0.0
    %118 = vmatmul.mubr.f32.gmra.mxu0 %v46
    %v119 = vpop.f32.mrf.mxu0
    %v120 = vadd.f32 %v39, %v119
    %v121 = vpop.f32.mrf.mxu0
    %122 = vdwg.mxu0
    %v123 = vmul.f32 %v115, 1.5957692
    %v124 = vmul.f32 %v120, 1.5957692
    %v125 = vmul.f32 %v115, %v115
    %v126 = vmul.f32 %v120, %v120
    %v127 = vmul.f32 %v125, %v115
    %v128 = vmul.f32 %v126, %v120
    %v129 = vmul.f32 %v127, 0.071354814
    %v130 = vmul.f32 %v128, 0.071354814
    %v131 = vadd.f32 %v123, %v129
    %v132 = vadd.f32 %v124, %v130
    %v133 = vxor.u32 %v131, 2147483648
    %v134 = vxor.u32 %v132, 2147483648
    %v135 = vmul.f32 %v133, 1.442695
    %v136 = vpow.pop %v135
    %v137 = vmul.f32 %v134, 1.442695
    %v138 = vpow.pop %v137
    %v139 = vadd.f32 %v136, 1.0
    %v140 = vadd.f32 %v138, 1.0
    %v141 = vrcp.pop %v139
    %v142 = vmul.f32 1.0, %v141
    %v143 = vrcp.pop %v140
    %v144 = vmul.f32 1.0, %v143
    %v145 = vmul.f32 %v115, %v142
    %v146 = vmul.f32 %v120, %v144
    %v147 = vld [vmem:[#allocation2] sm:$0xff]
    %v148 = vld [vmem:[#allocation2 + $0x8] sm:$0xff]
    %v149 = vld [vmem:[%s3] sm:$0xff]
    %v150 = vld [vmem:[%s3 + $0x8] sm:$0xff]
    %v151 = vld [vmem:[%s3 + $0x10] sm:$0xff]
    %v152 = vld [vmem:[%s3 + $0x18] sm:$0xff]
    %v153 = vld [vmem:[%s3 + $0x20] sm:$0xff]
    %v154 = vld [vmem:[%s3 + $0x28] sm:$0xff]
    %v155 = vld [vmem:[%s3 + $0x30] sm:$0xff]
    %v156 = vld [vmem:[%s3 + $0x38] sm:$0xff]
    %v157 = vld [vmem:[%s3 + $0x40] sm:$0xff]
    %v158 = vld [vmem:[%s3 + $0x48] sm:$0xff]
    %v159 = vld [vmem:[%s3 + $0x50] sm:$0xff]
    %v160 = vld [vmem:[%s3 + $0x58] sm:$0xff]
    %v161 = vld [vmem:[%s3 + $0x60] sm:$0xff]
    %v162 = vld [vmem:[%s3 + $0x68] sm:$0xff]
    %v163 = vld [vmem:[%s3 + $0x70] sm:$0xff]
    %v164 = vld [vmem:[%s3 + $0x78] sm:$0xff]
    %165 = vmatprep.subr.mxu0 0.0
    %166 = vmatpush1.msra.mxu0 %v164
    %167 = vmatprep.subr.mxu0 0.0
    %168 = vmatpush1.msra.mxu0 %v163
    %169 = vmatprep.subr.mxu0 0.0
    %170 = vmatpush1.msra.mxu0 %v162
    %171 = vmatprep.subr.mxu0 0.0
    %172 = vmatpush1.msra.mxu0 %v161
    %173 = vmatprep.subr.mxu0 0.0
    %174 = vmatpush1.msra.mxu0 %v160
    %175 = vmatprep.subr.mxu0 0.0
    %176 = vmatpush1.msra.mxu0 %v159
    %177 = vmatprep.subr.mxu0 0.0
    %178 = vmatpush1.msra.mxu0 %v158
    %179 = vmatprep.subr.mxu0 0.0
    %180 = vmatpush1.msra.mxu0 %v157
    %181 = vmatprep.subr.mxu0 0.0
    %182 = vmatpush1.msra.mxu0 %v156
    %183 = vmatprep.subr.mxu0 0.0
    %184 = vmatpush1.msra.mxu0 %v155
    %185 = vmatprep.subr.mxu0 0.0
    %186 = vmatpush1.msra.mxu0 %v154
    %187 = vmatprep.subr.mxu0 0.0
    %188 = vmatpush1.msra.mxu0 %v153
    %189 = vmatprep.subr.mxu0 0.0
    %190 = vmatpush1.msra.mxu0 %v152
    %191 = vmatprep.subr.mxu0 0.0
    %192 = vmatpush1.msra.mxu0 %v151
    %193 = vmatprep.subr.mxu0 0.0
    %194 = vmatpush1.msra.mxu0 %v150
    %195 = vmatprep.subr.mxu0 0.0
    %196 = vmatpush1.msra.mxu0 %v149
    %197 = vmatprep.subr.mxu0 0.0
    %198 = vmatpush2.msra.mxu0 0.0
    %199 = vmatprep.subr.mxu0 0.0
    %200 = vmatpush2.msra.mxu0 0.0
    %201 = vmatprep.subr.mxu0 0.0
    %202 = vmatpush2.msra.mxu0 0.0
    %203 = vmatprep.subr.mxu0 0.0
    %204 = vmatpush2.msra.mxu0 0.0
    %205 = vmatprep.subr.mxu0 0.0
    %206 = vmatpush2.msra.mxu0 0.0
    %207 = vmatprep.subr.mxu0 0.0
    %208 = vmatpush2.msra.mxu0 0.0
    %209 = vmatprep.subr.mxu0 0.0
    %210 = vmatpush2.msra.mxu0 0.0
    %211 = vmatprep.subr.mxu0 0.0
    %212 = vmatpush2.msra.mxu0 0.0
    %213 = vmatprep.subr.mxu0 0.0
    %214 = vmatpush2.msra.mxu0 0.0
    %215 = vmatprep.subr.mxu0 0.0
    %216 = vmatpush2.msra.mxu0 0.0
    %217 = vmatprep.subr.mxu0 0.0
    %218 = vmatpush2.msra.mxu0 0.0
    %219 = vmatprep.subr.mxu0 0.0
    %220 = vmatpush2.msra.mxu0 0.0
    %221 = vmatprep.subr.mxu0 0.0
    %222 = vmatpush2.msra.mxu0 0.0
    %223 = vmatprep.subr.mxu0 0.0
    %224 = vmatpush2.msra.mxu0 0.0
    %225 = vmatprep.subr.mxu0 0.0
    %226 = vmatpush2.msra.mxu0 0.0
    %227 = vmatprep.subr.mxu0 0.0
    %228 = vmatpush2.msra.mxu0 0.0
    %229 = vmatprep.mubr.f32.mxu0 0.0
    %230 = vmatmul.mubr.f32.gmra.mxu0 %v145
    %v231 = vpop.f32.mrf.mxu0
    %v232 = vadd.f32 0.0, %v231
    %v233 = vpop.f32.mrf.mxu0
    %234 = vmatprep.mubr.f32.mxu0 0.0
    %235 = vmatmul.mubr.f32.gmra.mxu0 %v146
    %v236 = vpop.f32.mrf.mxu0
    %v237 = vadd.f32 0.0, %v236
    %v238 = vpop.f32.mrf.mxu0
    %239 = vdwg.mxu0
    %v240 = vadd.f32 %v147, %v232
    %v241 = vadd.f32 %v148, %v237
    %242 = vst.msk [vmem:[#allocation2] sm:$0xff] %vm41, %v240
    %243 = vst.msk [vmem:[#allocation2 + $0x8] sm:$0xff] %vm41, %v241
    // Predicated region
    $region26: #{tpu_custom_call.1} parent=1 // pred_check
      %p244 = pneg %p21
    $region27: #{tpu_custom_call.1} parent=1 // pred_check_branch
      %246 = sbr.rel (%p244) target = $region29
    $region28: #{tpu_custom_call.1} parent=1 // pred_region
      %v247 = vld [vmem:[#allocation2] sm:$0xff]
      %v248 = vld [vmem:[#allocation2 + $0x8] sm:$0xff]
      %v249 = vld [vmem:[%s4] sm:$0x1]
      %v251 = vlaneseq
      %v252 = vshrl.u32 %v251, 7
      %v253 = vsub.s32 0, %v252
      %v254 = vrot.slane %v249, %v253
      %v256 = vadd.f32 %v247, %v254
      %v257 = vadd.f32 %v248, %v254
      %258 = vst.msk [vmem:[#allocation3] sm:$0xff] %vm41, %v256
      %259 = vst.msk [vmem:[#allocation3 + $0x8] sm:$0xff] %vm41, %v257
    $region29: #{tpu_custom_call.1} parent=1 // pred_fallthru
      _
    // Predicated region
    $region30: #{tpu_custom_call.1} parent=1 // pred_check
      _
    $region31: #{tpu_custom_call.1} parent=1 // pred_check_branch
      %261 = sbr.rel (0) target = $region33
    $region32: #{tpu_custom_call.1} parent=1 // pred_region
      %s263 = ssub.s32 256, 256
      %264 = vsyncadd [#allocation4], %s263
      %s265 = sshll.u32 [#allocation3], 4
      %s266 = int_to_ptr.vmem [resolvable:$true] %s265
      %271 = dma.vmem_to_hbm [thread:$0]  %s266, 256, %s5, [#allocation4], 128, 128, 8
    $region33: #{tpu_custom_call.1} parent=1 // pred_fallthru
      _
    // Predicated region
    $region34: #{tpu_custom_call.1} parent=1 // pred_check
      _
    $region35: #{tpu_custom_call.1} parent=1 // pred_check_branch
      %273 = sbr.rel (0) target = $region37
    $region36: #{tpu_custom_call.1} parent=1 // pred_region
      %274 = dma.done [#allocation4], 256
    $region37: #{tpu_custom_call.1} parent=1 // pred_fallthru
      _
    %275 = vsyncpa [#allocation4], 1

</llo_original>
